<compile_context>
chip_gen: v7x
topology: tpu7x:2x2x1
jax: 0.10.0
libtpu: 0.0.40
codegen_flags: <defaults>
</compile_context>

<pallas_src>
import math
from functools import partial, reduce

import jax
import jax.numpy as jnp
from jax.experimental import pallas as pl
from jax.experimental.pallas import tpu as pltpu


# ----------------------------------------------------------------------------
# Kernel: whole hypernetwork MLP on one tile of packed z rows.
# Each VMEM row holds PACK independent z vectors along lanes; the block-
# diagonal widened weights keep them independent through both matmuls, so a
# single fused grid step (no K axis) does everything.
# ----------------------------------------------------------------------------
def _hypernn_mlp_kernel(z_ref, w1_ref, b1_ref, w2_ref, b2_ref, out_ref):
    h = jnp.dot(z_ref[...], w1_ref[...], preferred_element_type=jnp.float32) + b1_ref[...]
    h = jnp.maximum(h, 0.0)                                                   # ReLU
    o = jnp.dot(h, w2_ref[...], preferred_element_type=jnp.float32) + b2_ref[...]
    out_ref[...] = o.astype(out_ref.dtype)


# ----------------------------------------------------------------------------
# Helpers
# ----------------------------------------------------------------------------
def _round_up(x, m):
    return ((x + m - 1) // m) * m


def _pick_pack(z_dim, out_features):
    """Smallest pack factor making both input and output lane-dense (128-mult);
    fall back to output-only density, then 1."""
    for p in (1, 2, 4, 8):
        if (p * out_features) % 128 == 0 and (p * z_dim) % 128 == 0:
            return p
    for p in (1, 2, 4, 8):
        if (p * out_features) % 128 == 0:
            return p
    return 1


def _block_diag(m, pack):
    """[r, c] -> [pack*r, pack*c] block-diagonal (one-time, build side)."""
    r, c = m.shape
    out = jnp.zeros((pack * r, pack * c), m.dtype)
    for i in range(pack):
        out = out.at[i * r:(i + 1) * r, i * c:(i + 1) * c].set(m)
    return out


# ----------------------------------------------------------------------------
# Forward: z_v [z_num, z_dim] -> out [z_num, out_features]
# Weight operands are the precomputed widened/block-diagonal f32 arrays.
# ----------------------------------------------------------------------------
@partial(jax.jit, static_argnames=("tile_rows",))
def hypernn_forward(z_v, w1t_wide, b1_wide, w2t_wide, b2_wide, *, tile_rows=512):
    z_num, z_dim = z_v.shape
    zw = w1t_wide.shape[0]                 # pack * z_dim
    pack = zw // z_dim
    hidden = w1t_wide.shape[1] // pack
    ow = w2t_wide.shape[1]                 # pack * out_features
    out_features = ow // pack

    # Packed-row geometry: pad packed rows up to a tile multiple (tile >= 8).
    mp = pl.cdiv(z_num, pack)
    tile = min(tile_rows, _round_up(mp, 8))
    mp_pad = _round_up(mp, tile)
    grid = (mp_pad // tile,)

    # Pack z: [z_num, z_dim] -> flat -> [mp_pad, pack*z_dim] (free row-major
    # reshape; packed row r holds original rows pack*r .. pack*r+pack-1).
    flat = z_v.astype(jnp.float32).reshape(-1)
    pad = mp_pad * pack * z_dim - flat.shape[0]
    if pad:
        flat = jnp.concatenate([flat, jnp.zeros((pad,), jnp.float32)])
    z_wide = flat.reshape(mp_pad, zw)

    cost = pl.CostEstimate(
        flops=2 * z_num * (z_dim * hidden + hidden * out_features),
        transcendentals=0,
        bytes_accessed=4 * (z_num * (z_dim + out_features)
                            + w1t_wide.size + b1_wide.size
                            + w2t_wide.size + b2_wide.size),
    )

    out_wide = pl.pallas_call(
        _hypernn_mlp_kernel,
        out_shape=jax.ShapeDtypeStruct((mp_pad, ow), jnp.float32),
        grid_spec=pltpu.PrefetchScalarGridSpec(
            num_scalar_prefetch=0,
            grid=grid,
            in_specs=[
                pl.BlockSpec((tile, zw), lambda i: (i, 0)),          # z tile (pipelined)
                pl.BlockSpec(w1t_wide.shape, lambda i: (0, 0)),      # weights: VMEM-resident
                pl.BlockSpec(b1_wide.shape, lambda i: (0, 0)),
                pl.BlockSpec(w2t_wide.shape, lambda i: (0, 0)),
                pl.BlockSpec(b2_wide.shape, lambda i: (0, 0)),
            ],
            out_specs=pl.BlockSpec((tile, ow), lambda i: (i, 0)),    # lane-dense output tile
        ),
        compiler_params=pltpu.CompilerParams(
            dimension_semantics=("parallel",),        # shards row tiles across v7x's 2 TCs
            vmem_limit_bytes=32 * 1024 * 1024,        # safe on v5e/v6e/v7x; tiles use ~1.5 MiB
        ),
        cost_estimate=cost,
    )(z_wide, w1t_wide, b1_wide, w2t_wide, b2_wide)

    # Unpack: [mp_pad, pack*out] -> [mp_pad*pack, out] (free row-major reshape),
    # drop padded rows.
    return out_wide.reshape(mp_pad * pack, out_features)[:z_num]


# ----------------------------------------------------------------------------
# Module setup glue (mirrors HyperNN.__init__ bookkeeping, no torch).
# All kernel-operand precompute happens here, once.
# ----------------------------------------------------------------------------
def build_hypernn(key, pnn_param_shapes, tiling=64, z_dim=32, hidden_size=8):
    out_features = tiling  # _get_out_features with tiling set

    # _get_z_num
    z_num = 0
    z_indexer = {}
    for name, shape in pnn_param_shapes.items():
        layer_size = reduce(lambda x, y: x * y, shape, 1)
        z_shard = math.ceil(layer_size / out_features)
        z_indexer[name] = slice(z_num, z_num + z_shard, 1)
        z_num += z_shard

    k_z, k_w1, k_w2 = jax.random.split(key, 3)

    # z_v ~ Normal(0, 0.1)
    z_v = 0.1 * jax.random.normal(k_z, (z_num, z_dim), dtype=jnp.float32)

    # kaiming_normal_ (fan_in, gain=sqrt(2)) for weights, zeros for biases.
    w1 = jax.random.normal(k_w1, (hidden_size, z_dim), dtype=jnp.float32) * math.sqrt(2.0 / z_dim)
    b1 = jnp.zeros((hidden_size,), dtype=jnp.float32)
    w2 = jax.random.normal(k_w2, (out_features, hidden_size), dtype=jnp.float32) * math.sqrt(2.0 / hidden_size)
    b2 = jnp.zeros((out_features,), dtype=jnp.float32)

    # One-time kernel operand precompute: pre-transposed, packed block-diagonal,
    # f32 — no per-call transpose/cast/reshape XLA ops remain.
    pack = _pick_pack(z_dim, out_features)
    w1t_wide = _block_diag(w1.T.astype(jnp.float32), pack)                     # [P*z_dim, P*hidden]
    b1_wide = jnp.tile(b1.reshape(1, -1).astype(jnp.float32), (1, pack))       # [1, P*hidden]
    w2t_wide = _block_diag(w2.T.astype(jnp.float32), pack)                     # [P*hidden, P*out]
    b2_wide = jnp.tile(b2.reshape(1, -1).astype(jnp.float32), (1, pack))       # [1, P*out]

    params = dict(z_v=z_v, w1=w1, b1=b1, w2=w2, b2=b2,
                  w1t_wide=w1t_wide, b1_wide=b1_wide,
                  w2t_wide=w2t_wide, b2_wide=b2_wide)
    return params, z_indexer, list(pnn_param_shapes.keys())


def hypernn_apply(params, z_indexer, pnn_modules, layer_index=None):
    """Matches HyperNN.forward semantics: row i of the returned array equals
    element i of the PyTorch list.  Returns one contiguous array (full matrix
    or one layer shard) instead of a Python list of per-row slices to avoid
    hundreds of tiny XLA dispatches."""
    full = hypernn_forward(params["z_v"], params["w1t_wide"], params["b1_wide"],
                           params["w2t_wide"], params["b2_wide"])
    if layer_index is None:
        return full
    if isinstance(layer_index, int):
        module_name = pnn_modules[layer_index]
    else:
        module_name = layer_index
    sh = z_indexer[module_name]
    return full[sh.start:sh.stop]
    # TODO(synk): evolve()/_update_pnn() (in-place PNN weight mutation) are
    # host-side glue in the original module and are not kernel work.


# ----------------------------------------------------------------------------
if __name__ == "__main__":
    # Synthetic "pnn": small policy MLP (obs=8, hidden=16, actions=4) whose
    # parameter shapes drive z_num / z_indexer exactly like the torch code.
    pnn_param_shapes = {
        "fc1.weight": (16, 8),   # 128 elems -> 2 z-shards (tiling=64)
        "fc1.bias":   (16,),     # 1 shard
        "fc2.weight": (4, 16),   # 1 shard
        "fc2.bias":   (4,),      # 1 shard
    }

    key = jax.random.PRNGKey(0)
    params, z_indexer, pnn_modules = build_hypernn(
        key, pnn_param_shapes, tiling=64, z_dim=32, hidden_size=8
    )

    # Full forward (layer_index=None) -> [z_num, out_features]
    out = hypernn_apply(params, z_indexer, pnn_modules, layer_index=None)
    out = jax.block_until_ready(out)

    # Sharded forward for one named layer (exercise the indexer path).
    out_fc1w = hypernn_apply(params, z_indexer, pnn_modules, layer_index="fc1.weight")
    out_fc1w = jax.block_until_ready(out_fc1w)

    # Reference check in plain JAX against the raw (untransposed) weights.
    z, w1, b1, w2, b2 = (params["z_v"], params["w1"], params["b1"],
                         params["w2"], params["b2"])
    ref = jnp.maximum(z @ w1.T + b1, 0.0) @ w2.T + b2
    assert out.shape == (z.shape[0], 64), out.shape
    assert jnp.allclose(out, ref, atol=1e-5, rtol=1e-5)
    sh = z_indexer["fc1.weight"]
    assert out_fc1w.shape == (sh.stop - sh.start, 64)
    assert jnp.allclose(out_fc1w, ref[sh.start:sh.stop], atol=1e-5, rtol=1e-5)

    print("KERNEL_OK")
</pallas_src>

<mosaic_0001>
module attributes {stable_mosaic.version = 11 : i64} {
  func.func @_hypernn_mlp_kernel(%arg0: i32, %arg1: memref<8x128xf32, #tpu.memory_space<vmem>>, %arg2: memref<128x32xf32, #tpu.memory_space<vmem>>, %arg3: memref<1x32xf32, #tpu.memory_space<vmem>>, %arg4: memref<32x256xf32, #tpu.memory_space<vmem>>, %arg5: memref<1x256xf32, #tpu.memory_space<vmem>>, %arg6: memref<8x256xf32, #tpu.memory_space<vmem>>) attributes {dimension_semantics = [#tpu.dimension_semantics<parallel>], iteration_bounds = array<i64: 1>, scalar_prefetch = 0 : i64, scratch_operands = 0 : i64, tpu.core_type = #tpu.core_type<tc>, window_params = [{transform_indices = @transform_0, window_bounds = array<i64: 8, 128>}, {pipeline_mode = #tpu.pipeline_mode<synchronous>, transform_indices = @transform_1, window_bounds = array<i64: 128, 32>}, {pipeline_mode = #tpu.pipeline_mode<synchronous>, transform_indices = @transform_2, window_bounds = array<i64: 1, 32>}, {pipeline_mode = #tpu.pipeline_mode<synchronous>, transform_indices = @transform_3, window_bounds = array<i64: 32, 256>}, {pipeline_mode = #tpu.pipeline_mode<synchronous>, transform_indices = @transform_4, window_bounds = array<i64: 1, 256>}, {transform_indices = @transform_5, window_bounds = array<i64: 8, 256>}]} {
    %c0 = arith.constant 0 : index
    %c0_0 = arith.constant 0 : index
    %0 = vector.load %arg1[%c0, %c0_0] : memref<8x128xf32, #tpu.memory_space<vmem>>, vector<8x128xf32>
    %c0_1 = arith.constant 0 : index
    %c0_2 = arith.constant 0 : index
    %1 = vector.load %arg2[%c0_1, %c0_2] : memref<128x32xf32, #tpu.memory_space<vmem>>, vector<128x32xf32>
    %cst = arith.constant dense<0.000000e+00> : vector<8x32xf32>
    %2 = tpu.matmul %0, %1, %cst {dimension_numbers = #tpu.dot_dimension_numbers<[1], [0], [0], [1], [0, 0, 1, 1], [], []>} : vector<8x128xf32>, vector<128x32xf32>, vector<8x32xf32> -> vector<8x32xf32>
    %c0_3 = arith.constant 0 : index
    %c0_4 = arith.constant 0 : index
    %3 = vector.load %arg3[%c0_3, %c0_4] : memref<1x32xf32, #tpu.memory_space<vmem>>, vector<1x32xf32>
    %4 = vector.broadcast %3 : vector<1x32xf32> to vector<8x32xf32>
    %5 = arith.addf %2, %4 : vector<8x32xf32>
    %cst_5 = arith.constant 0.000000e+00 : f32
    %6 = vector.broadcast %cst_5 : f32 to vector<8x32xf32>
    %7 = arith.maximumf %5, %6 : vector<8x32xf32>
    %c0_6 = arith.constant 0 : index
    %c0_7 = arith.constant 0 : index
    %8 = vector.load %arg4[%c0_6, %c0_7] : memref<32x256xf32, #tpu.memory_space<vmem>>, vector<32x256xf32>
    %cst_8 = arith.constant dense<0.000000e+00> : vector<8x256xf32>
    %9 = tpu.matmul %7, %8, %cst_8 {dimension_numbers = #tpu.dot_dimension_numbers<[1], [0], [0], [1], [0, 0, 1, 1], [], []>} : vector<8x32xf32>, vector<32x256xf32>, vector<8x256xf32> -> vector<8x256xf32>
    %c0_9 = arith.constant 0 : index
    %c0_10 = arith.constant 0 : index
    %10 = vector.load %arg5[%c0_9, %c0_10] : memref<1x256xf32, #tpu.memory_space<vmem>>, vector<1x256xf32>
    %11 = vector.broadcast %10 : vector<1x256xf32> to vector<8x256xf32>
    %12 = arith.addf %9, %11 : vector<8x256xf32>
    %c0_11 = arith.constant 0 : index
    %c0_12 = arith.constant 0 : index
    %13 = vector.load %arg6[%c0_11, %c0_12] : memref<8x256xf32, #tpu.memory_space<vmem>>, vector<8x256xf32>
    tpu.vector_store %arg6[%c0_11, %c0_12], %12 {strides = array<i32>} : memref<8x256xf32, #tpu.memory_space<vmem>>, vector<8x256xf32>,
    return
  }
  func.func @transform_0(%arg0: i32) -> (i32, i32) {
    %c0_i32 = arith.constant 0 : i32
    %c0_i32_0 = arith.constant 0 : i32
    return %arg0, %c0_i32 : i32, i32
  }
  func.func @transform_1(%arg0: i32) -> (i32, i32) {
    %c0_i32 = arith.constant 0 : i32
    %c0_i32_0 = arith.constant 0 : i32
    %c0_i32_1 = arith.constant 0 : i32
    return %c0_i32, %c0_i32_0 : i32, i32
  }
  func.func @transform_2(%arg0: i32) -> (i32, i32) {
    %c0_i32 = arith.constant 0 : i32
    %c0_i32_0 = arith.constant 0 : i32
    %c0_i32_1 = arith.constant 0 : i32
    return %c0_i32, %c0_i32_0 : i32, i32
  }
  func.func @transform_3(%arg0: i32) -> (i32, i32) {
    %c0_i32 = arith.constant 0 : i32
    %c0_i32_0 = arith.constant 0 : i32
    %c0_i32_1 = arith.constant 0 : i32
    return %c0_i32, %c0_i32_0 : i32, i32
  }
  func.func @transform_4(%arg0: i32) -> (i32, i32) {
    %c0_i32 = arith.constant 0 : i32
    %c0_i32_0 = arith.constant 0 : i32
    %c0_i32_1 = arith.constant 0 : i32
    return %c0_i32, %c0_i32_0 : i32, i32
  }
  func.func @transform_5(%arg0: i32) -> (i32, i32) {
    %c0_i32 = arith.constant 0 : i32
    %c0_i32_0 = arith.constant 0 : i32
    return %arg0, %c0_i32 : i32, i32
  }
}

</mosaic_0001>

<llo_original>
// kernel: hypernn_forward.1
$region0: #{hypernn_forward.1}
  #allocation0 [shape = 'u32[]', space=smem, size = 0x4, offset = 0x4, fixed_abs, tag = 'smem constant byte address 0x4 - core index']
  #allocation1 [shape = 'u32[144,128]{1,0:T(1,128)}', space=vmem, size = 0x12000, scoped, tag = 'internal scratch']
  %s0 = inlined_call_operand.vmem [shape: f32[8,128], index: 0, kind: input, shape index: {}]
  %s1 = inlined_call_operand.vmem [shape: f32[128,32], index: 1, kind: input, shape index: {}]
  %s2 = inlined_call_operand.vmem [shape: f32[1,32], index: 2, kind: input, shape index: {}]
  %s3 = inlined_call_operand.vmem [shape: f32[32,256], index: 3, kind: input, shape index: {}]
  %s4 = inlined_call_operand.vmem [shape: f32[1,256], index: 4, kind: input, shape index: {}]
  %s5 = inlined_call_operand.vmem [shape: f32[8,256], index: 5, kind: output, shape index: {}]
  %s6 = sld [smem:[#allocation0]]
  $region30: #{hypernn_forward.1} parent=0
    _
  %s8 = ssub.s32 1, %s6
  %s9 = scalar_select 0, %s8, %s6
  // Predicated region
  $region2: #{hypernn_forward.1} parent=0 // pred_check
    _
  $region3: #{hypernn_forward.1} parent=0 // pred_check_branch
    %11 = sbr.rel (0) target = $region5
  $region4: #{hypernn_forward.1} parent=0 // pred_region
    _
  $region5: #{hypernn_forward.1} parent=0 // pred_fallthru
    _
  // Predicated region
  $region6: #{hypernn_forward.1} parent=0 // pred_check
    _
  $region7: #{hypernn_forward.1} parent=0 // pred_check_branch
    %13 = sbr.rel (0) target = $region9
  $region8: #{hypernn_forward.1} parent=0 // pred_region
    _
  $region9: #{hypernn_forward.1} parent=0 // pred_fallthru
    _
  // Predicated region
  $region10: #{hypernn_forward.1} parent=0 // pred_check
    _
  $region11: #{hypernn_forward.1} parent=0 // pred_check_branch
    %15 = sbr.rel (0) target = $region13
  $region12: #{hypernn_forward.1} parent=0 // pred_region
    _
  $region13: #{hypernn_forward.1} parent=0 // pred_fallthru
    _
  // Predicated region
  $region14: #{hypernn_forward.1} parent=0 // pred_check
    _
  $region15: #{hypernn_forward.1} parent=0 // pred_check_branch
    %17 = sbr.rel (0) target = $region17
  $region16: #{hypernn_forward.1} parent=0 // pred_region
    _
  $region17: #{hypernn_forward.1} parent=0 // pred_fallthru
    _
  // Predicated region
  $region18: #{hypernn_forward.1} parent=0 // pred_check
    _
  $region19: #{hypernn_forward.1} parent=0 // pred_check_branch
    %19 = sbr.rel (0) target = $region21
  $region20: #{hypernn_forward.1} parent=0 // pred_region
    _
  $region21: #{hypernn_forward.1} parent=0 // pred_fallthru
    _
  %v20 = vld [vmem:[%s0] sm:$0xff]
  %v21 = vld [vmem:[%s1] sm:$0xff]
  %v22 = vld [vmem:[%s1 + $0x8] sm:$0xff]
  %v23 = vld [vmem:[%s1 + $0x10] sm:$0xff]
  %v24 = vld [vmem:[%s1 + $0x18] sm:$0xff]
  %v25 = vld [vmem:[%s1 + $0x20] sm:$0xff]
  %v26 = vld [vmem:[%s1 + $0x28] sm:$0xff]
  %v27 = vld [vmem:[%s1 + $0x30] sm:$0xff]
  %v28 = vld [vmem:[%s1 + $0x38] sm:$0xff]
  %v29 = vld [vmem:[%s1 + $0x40] sm:$0xff]
  %v30 = vld [vmem:[%s1 + $0x48] sm:$0xff]
  %v31 = vld [vmem:[%s1 + $0x50] sm:$0xff]
  %v32 = vld [vmem:[%s1 + $0x58] sm:$0xff]
  %v33 = vld [vmem:[%s1 + $0x60] sm:$0xff]
  %v34 = vld [vmem:[%s1 + $0x68] sm:$0xff]
  %v35 = vld [vmem:[%s1 + $0x70] sm:$0xff]
  %v36 = vld [vmem:[%s1 + $0x78] sm:$0xff]
  %v37 = vld [vmem:[%s2] sm:$0x1]
  %v39 = vlaneseq
  %v40 = vshrl.u32 %v39, 7
  %v41 = vsub.s32 0, %v40
  %v42 = vrot.slane %v37, %v41
  %44 = vmatprep.subr.mxu0 0.0
  %45 = vmatpush1.msra.mxu0 %v21
  %46 = vmatprep.subr.mxu0 0.0
  %47 = vmatpush1.msra.mxu0 %v22
  %48 = vmatprep.subr.mxu0 0.0
  %49 = vmatpush1.msra.mxu0 %v23
  %50 = vmatprep.subr.mxu0 0.0
  %51 = vmatpush1.msra.mxu0 %v24
  %52 = vmatprep.subr.mxu0 0.0
  %53 = vmatpush1.msra.mxu0 %v25
  %54 = vmatprep.subr.mxu0 0.0
  %55 = vmatpush1.msra.mxu0 %v26
  %56 = vmatprep.subr.mxu0 0.0
  %57 = vmatpush1.msra.mxu0 %v27
  %58 = vmatprep.subr.mxu0 0.0
  %59 = vmatpush1.msra.mxu0 %v28
  %60 = vmatprep.subr.mxu0 0.0
  %61 = vmatpush1.msra.mxu0 %v29
  %62 = vmatprep.subr.mxu0 0.0
  %63 = vmatpush1.msra.mxu0 %v30
  %64 = vmatprep.subr.mxu0 0.0
  %65 = vmatpush1.msra.mxu0 %v31
  %66 = vmatprep.subr.mxu0 0.0
  %67 = vmatpush1.msra.mxu0 %v32
  %68 = vmatprep.subr.mxu0 0.0
  %69 = vmatpush1.msra.mxu0 %v33
  %70 = vmatprep.subr.mxu0 0.0
  %71 = vmatpush1.msra.mxu0 %v34
  %72 = vmatprep.subr.mxu0 0.0
  %73 = vmatpush1.msra.mxu0 %v35
  %74 = vmatprep.subr.mxu0 0.0
  %75 = vmatpush1.msra.mxu0 %v36
  %76 = vmatprep.subr.mxu0 0.0
  %77 = vmatpush1.msra.mxu0 0.0
  %78 = vmatprep.subr.mxu0 0.0
  %79 = vmatpush1.msra.mxu0 0.0
  %80 = vmatprep.subr.mxu0 0.0
  %81 = vmatpush1.msra.mxu0 0.0
  %82 = vmatprep.subr.mxu0 0.0
  %83 = vmatpush1.msra.mxu0 0.0
  %84 = vmatprep.subr.mxu0 0.0
  %85 = vmatpush1.msra.mxu0 0.0
  %86 = vmatprep.subr.mxu0 0.0
  %87 = vmatpush1.msra.mxu0 0.0
  %88 = vmatprep.subr.mxu0 0.0
  %89 = vmatpush1.msra.mxu0 0.0
  %90 = vmatprep.subr.mxu0 0.0
  %91 = vmatpush1.msra.mxu0 0.0
  %92 = vmatprep.subr.mxu0 0.0
  %93 = vmatpush1.msra.mxu0 0.0
  %94 = vmatprep.subr.mxu0 0.0
  %95 = vmatpush1.msra.mxu0 0.0
  %96 = vmatprep.subr.mxu0 0.0
  %97 = vmatpush1.msra.mxu0 0.0
  %98 = vmatprep.subr.mxu0 0.0
  %99 = vmatpush1.msra.mxu0 0.0
  %100 = vmatprep.subr.mxu0 0.0
  %101 = vmatpush1.msra.mxu0 0.0
  %102 = vmatprep.subr.mxu0 0.0
  %103 = vmatpush1.msra.mxu0 0.0
  %104 = vmatprep.subr.mxu0 0.0
  %105 = vmatpush1.msra.mxu0 0.0
  %106 = vmatprep.subr.mxu0 0.0
  %107 = vmatpush1.msra.mxu0 0.0
  %108 = vmatprep.mubr.f32.mxu0 0.0
  %109 = vmatmul.mubr.f32.gmra.mrb[0].mxu0 %v20
  %v110 = vpop.f32.mrb[0].mxu0
  %v111 = vadd.f32 %v42, %v110
  %v112 = vpop.f32.mrb[0].mxu0
  %113 = vdwg.mxu0
  %v114 = vmax.f32 %v111, 0.0
  %v115 = vld [vmem:[%s3] sm:$0xff]
  %v116 = vld [vmem:[%s3 + $0x8] sm:$0xff]
  %v117 = vld [vmem:[%s3 + $0x10] sm:$0xff]
  %v118 = vld [vmem:[%s3 + $0x18] sm:$0xff]
  %v119 = vld [vmem:[%s3 + $0x20] sm:$0xff]
  %v120 = vld [vmem:[%s3 + $0x28] sm:$0xff]
  %v121 = vld [vmem:[%s3 + $0x30] sm:$0xff]
  %v122 = vld [vmem:[%s3 + $0x38] sm:$0xff]
  %v123 = vld [vmem:[%s4] sm:$0x3]
  %v125 = vlaneseq
  %v126 = vshrl.u32 %v125, 7
  %v127 = vsub.s32 0, %v126
  %v128 = vrot.slane %v123, %v127
  %v129 = vlaneseq
  %v130 = vshrl.u32 %v129, 7
  %v131 = vsub.s32 1, %v130
  %v132 = vrot.slane %v123, %v131
  %vm135 = vcmask 261120
  %v137 = vsel %vm135, %v114, 0
  %139 = vmatprep.subr.mxu0 %v116
  %140 = vmatpush1.msra.mxu0 %v115
  %141 = vmatprep.subr.mxu0 %v118
  %142 = vmatpush1.msra.mxu0 %v117
  %143 = vmatprep.subr.mxu0 %v120
  %144 = vmatpush1.msra.mxu0 %v119
  %145 = vmatprep.subr.mxu0 %v122
  %146 = vmatpush1.msra.mxu0 %v121
  %147 = vmatprep.subr.mxu0 0.0
  %148 = vmatpush1.msra.mxu0 0.0
  %149 = vmatprep.subr.mxu0 0.0
  %150 = vmatpush1.msra.mxu0 0.0
  %151 = vmatprep.subr.mxu0 0.0
  %152 = vmatpush1.msra.mxu0 0.0
  %153 = vmatprep.subr.mxu0 0.0
  %154 = vmatpush1.msra.mxu0 0.0
  %155 = vmatprep.subr.mxu0 0.0
  %156 = vmatpush1.msra.mxu0 0.0
  %157 = vmatprep.subr.mxu0 0.0
  %158 = vmatpush1.msra.mxu0 0.0
  %159 = vmatprep.subr.mxu0 0.0
  %160 = vmatpush1.msra.mxu0 0.0
  %161 = vmatprep.subr.mxu0 0.0
  %162 = vmatpush1.msra.mxu0 0.0
  %163 = vmatprep.subr.mxu0 0.0
  %164 = vmatpush1.msra.mxu0 0.0
  %165 = vmatprep.subr.mxu0 0.0
  %166 = vmatpush1.msra.mxu0 0.0
  %167 = vmatprep.subr.mxu0 0.0
  %168 = vmatpush1.msra.mxu0 0.0
  %169 = vmatprep.subr.mxu0 0.0
  %170 = vmatpush1.msra.mxu0 0.0
  %171 = vmatprep.subr.mxu0 0.0
  %172 = vmatpush1.msra.mxu0 0.0
  %173 = vmatprep.subr.mxu0 0.0
  %174 = vmatpush1.msra.mxu0 0.0
  %175 = vmatprep.subr.mxu0 0.0
  %176 = vmatpush1.msra.mxu0 0.0
  %177 = vmatprep.subr.mxu0 0.0
  %178 = vmatpush1.msra.mxu0 0.0
  %179 = vmatprep.subr.mxu0 0.0
  %180 = vmatpush1.msra.mxu0 0.0
  %181 = vmatprep.subr.mxu0 0.0
  %182 = vmatpush1.msra.mxu0 0.0
  %183 = vmatprep.subr.mxu0 0.0
  %184 = vmatpush1.msra.mxu0 0.0
  %185 = vmatprep.subr.mxu0 0.0
  %186 = vmatpush1.msra.mxu0 0.0
  %187 = vmatprep.subr.mxu0 0.0
  %188 = vmatpush1.msra.mxu0 0.0
  %189 = vmatprep.subr.mxu0 0.0
  %190 = vmatpush1.msra.mxu0 0.0
  %191 = vmatprep.subr.mxu0 0.0
  %192 = vmatpush1.msra.mxu0 0.0
  %193 = vmatprep.subr.mxu0 0.0
  %194 = vmatpush1.msra.mxu0 0.0
  %195 = vmatprep.subr.mxu0 0.0
  %196 = vmatpush1.msra.mxu0 0.0
  %197 = vmatprep.subr.mxu0 0.0
  %198 = vmatpush1.msra.mxu0 0.0
  %199 = vmatprep.subr.mxu0 0.0
  %200 = vmatpush1.msra.mxu0 0.0
  %201 = vmatprep.subr.mxu0 0.0
  %202 = vmatpush1.msra.mxu0 0.0
  %203 = vmatprep.mubr.f32.mxu0 0.0
  %204 = vmatmul.mubr.f32.gmra.mrb[0].mxu0 %v137
  %v205 = vpop.f32.mrb[0].mxu0
  %v206 = vadd.f32 %v128, %v205
  %v207 = vpop.f32.mrb[0].mxu0
  %v208 = vadd.f32 %v132, %v207
  %209 = vdwg.mxu0
  %210 = vst [vmem:[%s5] sm:$0xff] %v206
  %211 = vst [vmem:[%s5 + $0x8] sm:$0xff] %v208
  // Predicated region
  $region22: #{hypernn_forward.1} parent=0 // pred_check
    _
  $region23: #{hypernn_forward.1} parent=0 // pred_check_branch
    %213 = sbr.rel (0) target = $region25
  $region24: #{hypernn_forward.1} parent=0 // pred_region
    _
  $region25: #{hypernn_forward.1} parent=0 // pred_fallthru
    _
  // Predicated region
  $region26: #{hypernn_forward.1} parent=0 // pred_check
    _
  $region27: #{hypernn_forward.1} parent=0 // pred_check_branch
    %215 = sbr.rel (0) target = $region29
  $region28: #{hypernn_forward.1} parent=0 // pred_region
    _
  $region29: #{hypernn_forward.1} parent=0 // pred_fallthru
    _

</llo_original>
